<compile_context>
chip_gen: v6e
topology: v6e:2x2x1
jax: 0.10.0
libtpu: 0.0.40
codegen_flags: <defaults>
</compile_context>

<pallas_src>
import functools

import jax
import jax.numpy as jnp
from jax import lax
from jax.experimental import pallas as pl
from jax.experimental.pallas import tpu as pltpu


def _round_up(v, m):
    return (v + m - 1) // m * m


def _center_loss_kernel(labels_ref, x_ref, centers_ref, out_ref, gathered_acc,
                        *, batch_size, mask_rows):
    """One (batch-tile, class-tile) grid step.

    labels_ref  : VMEM (tb, 1) int32   -- labels for this batch tile
    x_ref       : VMEM (tb, D)         -- features for this batch tile
    centers_ref : VMEM (tc, D)         -- current class tile of the centers
                                          table (resident when nct == 1)
    out_ref     : VMEM (8, 128) f32    -- per-batch-tile partial sum (broadcast)
    gathered_acc: VMEM (tb, D) f32     -- accumulated gathered centers rows
    """
    t = pl.program_id(0)          # batch-tile index  ("parallel")
    ct = pl.program_id(1)         # class-tile index  ("arbitrary" reduction)
    tb = x_ref.shape[0]
    tc = centers_ref.shape[0]

    @pl.when(ct == 0)
    def _init():
        gathered_acc[...] = jnp.zeros_like(gathered_acc)

    # In-VMEM gather of the labeled center rows for this class tile:
    # one-hot (tb, tc) @ centers (tc, D) on the MXU.  HIGHEST precision keeps
    # the multiply-by-{0,1} gather exact for f32 centers.
    lbl = labels_ref[...]                                              # (tb, 1)
    class_ids = ct * tc + lax.broadcasted_iota(jnp.int32, (tb, tc), 1)
    onehot = (lbl == class_ids).astype(jnp.float32)                    # (tb, tc)
    gathered_acc[...] += jnp.dot(
        onehot,
        centers_ref[...].astype(jnp.float32),
        preferred_element_type=jnp.float32,
        precision=lax.Precision.HIGHEST)

    @pl.when(ct == pl.num_programs(1) - 1)
    def _finish():
        x = x_ref[...].astype(jnp.float32)                 # (tb, D)
        diff = x - gathered_acc[...]
        dist_sq = jnp.sum(diff * diff, axis=-1, keepdims=True)          # (tb, 1)
        dist = jnp.sqrt(jnp.maximum(dist_sq, 1e-12))
        if mask_rows:  # static: only emitted when the batch was actually padded
            row_ids = t * tb + lax.broadcasted_iota(jnp.int32, (tb, 1), 0)
            dist = jnp.where(row_ids < batch_size, dist, 0.0)
        tile_sum = jnp.sum(dist)
        # Lane-dense (8, 128) partial-sum block; reduced in plain JAX.
        out_ref[...] = jnp.full(out_ref.shape, tile_sum, dtype=out_ref.dtype)


def center_loss_forward(x, labels, centers, *, learning_weight=False,
                        uncertainty=None, batch_tile=512,
                        centers_vmem_budget_bytes=12 * 1024 * 1024,
                        x_tile_budget_bytes=4 * 1024 * 1024):
    """x: (B, D) float, labels: (B,) int, centers: (C, D) float -> scalar loss."""
    B, D = x.shape
    C, Dc = centers.shape
    assert D == Dc
    assert labels.shape[0] == B, "features.size(0) is not equal to labels.size(0)"
    if learning_weight:
        assert uncertainty is not None, "learning_weight=True requires `uncertainty`"

    # ---- batch tiling: as large as the VMEM x-tile budget / batch allows ----
    tb_cap = max(8, (x_tile_budget_bytes // (D * x.dtype.itemsize)) // 8 * 8)
    b_pad8 = _round_up(B, 8)
    tb = max(8, min(_round_up(batch_tile, 8), tb_cap, b_pad8))
    nbt = pl.cdiv(b_pad8, tb)
    b_pad = nbt * tb
    has_pad = b_pad != B          # only ragged batches get padded (demo: no pad)

    labels_i32 = labels.astype(jnp.int32).reshape(B, 1)
    if has_pad:
        x_in = jnp.pad(x, ((0, b_pad - B), (0, 0)))
        labels_in = jnp.pad(labels_i32, ((0, b_pad - B), (0, 0)))
    else:
        x_in = x
        labels_in = labels_i32

    # ---- centers: VMEM-resident if small enough, else streamed class tiles ----
    centers_bytes = C * D * centers.dtype.itemsize
    if centers_bytes <= centers_vmem_budget_bytes:
        tc, nct = C, 1
        centers_in = centers
    else:
        tc = max(8, (centers_vmem_budget_bytes // (D * centers.dtype.itemsize)) // 8 * 8)
        nct = pl.cdiv(C, tc)
        c_pad = nct * tc
        # Zero-pad the tail class rows: padded class ids never match a label,
        # so their one-hot weight is exactly 0 and they contribute nothing.
        centers_in = (jnp.pad(centers, ((0, c_pad - C), (0, 0)))
                      if c_pad != C else centers)

    kernel = functools.partial(_center_loss_kernel,
                               batch_size=B, mask_rows=has_pad)

    grid_spec = pltpu.PrefetchScalarGridSpec(
        num_scalar_prefetch=0,
        grid=(nbt, nct),
        in_specs=[
            pl.BlockSpec((tb, 1), lambda t, ct: (t, 0)),   # labels tile
            pl.BlockSpec((tb, D), lambda t, ct: (t, 0)),   # features tile
            pl.BlockSpec((tc, D), lambda t, ct: (ct, 0)),  # centers (resident if nct==1)
        ],
        out_specs=pl.BlockSpec((8, 128), lambda t, ct: (t, 0)),
        scratch_shapes=[pltpu.VMEM((tb, D), jnp.float32)],  # gathered centers rows
    )

    # VMEM footprint (double-buffered inputs/outputs + scratch) with headroom,
    # capped at 48 MiB so it stays safe on v7x's 64 MiB physical VMEM.
    vmem_need = (2 * tc * D * centers.dtype.itemsize
                 + 2 * tb * D * x.dtype.itemsize
                 + 2 * tb * 4
                 + 2 * 8 * 128 * 4
                 + tb * D * 4)
    vmem_limit = int(min(max(vmem_need + (8 << 20), 32 << 20), 48 << 20))

    out = pl.pallas_call(
        kernel,
        out_shape=jax.ShapeDtypeStruct((nbt * 8, 128), jnp.float32),
        grid_spec=grid_spec,
        compiler_params=pltpu.CompilerParams(
            # Batch tiles are independent (per-tile partial outputs) -> parallel
            # (both TensorCores on v7x).  Class axis carries the gather scratch
            # and revisits the output block -> arbitrary.
            dimension_semantics=("parallel", "arbitrary"),
            vmem_limit_bytes=vmem_limit),
    )(labels_in, x_in, centers_in)

    partial = out.reshape(nbt, 8, 128)[:, 0, 0]     # one partial sum per batch tile
    loss = jnp.sum(partial) / jnp.float32(B)
    if learning_weight:
        # loss = 0.5 * exp(-u) * loss + u   (tiny scalar glue, plain JAX)
        loss = 0.5 * jnp.exp(-uncertainty) * loss + uncertainty
    return loss


def center_loss_reference(x, labels, centers):
    """Pure-JAX reference matching the PyTorch module's math (exact f32)."""
    diff = x[:, None, :] - centers[None, :, :]
    dist_mat = jnp.sqrt(jnp.maximum(jnp.sum(diff * diff, axis=-1), 1e-12))
    mask = labels[:, None] == jnp.arange(centers.shape[0])[None, :]
    return jnp.sum(jnp.where(mask, dist_mat, 0.0)) / x.shape[0]


if __name__ == "__main__":
    # Small, deterministic config consistent with the module's forward.
    batch_size, feat_dim, num_classes = 8, 32, 16

    key = jax.random.PRNGKey(0)
    kx, kl, kc = jax.random.split(key, 3)

    x = jax.random.normal(kx, (batch_size, feat_dim), dtype=jnp.float32)
    labels = jax.random.randint(kl, (batch_size,), 0, num_classes, dtype=jnp.int32)
    # nn.Parameter(torch.randn(num_classes, feat_dim)) -> deterministic normal init.
    centers = jax.random.normal(kc, (num_classes, feat_dim), dtype=jnp.float32)

    loss = center_loss_forward(x, labels, centers, learning_weight=False)
    loss = jax.block_until_ready(loss)

    ref = center_loss_reference(x, labels, centers)
    assert jnp.allclose(loss, ref, rtol=1e-3, atol=1e-3), (loss, ref)

    print("KERNEL_OK")
</pallas_src>

<mosaic_0001>
module attributes {stable_mosaic.version = 11 : i64} {
  func.func @_center_loss_kernel(%arg0: i32, %arg1: i32, %arg2: memref<8x1xi32, #tpu.memory_space<vmem>>, %arg3: memref<8x32xf32, #tpu.memory_space<vmem>>, %arg4: memref<16x32xf32, #tpu.memory_space<vmem>>, %arg5: memref<8x128xf32, #tpu.memory_space<vmem>>, %arg6: memref<8x32xf32, #tpu.memory_space<vmem>>) attributes {dimension_semantics = [#tpu.dimension_semantics<parallel>, #tpu.dimension_semantics<arbitrary>], iteration_bounds = array<i64: 1, 1>, scalar_prefetch = 0 : i64, scratch_operands = 1 : i64, tpu.core_type = #tpu.core_type<tc>, window_params = [{transform_indices = @transform_0, window_bounds = array<i64: 8, 1>}, {transform_indices = @transform_1, window_bounds = array<i64: 8, 32>}, {transform_indices = @transform_2, window_bounds = array<i64: 16, 32>}, {transform_indices = @transform_3, window_bounds = array<i64: 8, 128>}]} {
    %c0_i32 = arith.constant 0 : i32
    %0 = arith.cmpi eq, %arg1, %c0_i32 : i32
    %1 = arith.extui %0 : i1 to i32
    %c0_i32_0 = arith.constant 0 : i32
    %2 = arith.cmpi ne, %1, %c0_i32_0 : i32
    scf.if %2 {
      %cst_10 = arith.constant 0.000000e+00 : f32
      %20 = vector.broadcast %cst_10 : f32 to vector<8x32xf32>
      %c0_11 = arith.constant 0 : index
      %c0_12 = arith.constant 0 : index
      %21 = vector.load %arg6[%c0_11, %c0_12] : memref<8x32xf32, #tpu.memory_space<vmem>>, vector<8x32xf32>
      tpu.vector_store %arg6[%c0_11, %c0_12], %20 {strides = array<i32>} : memref<8x32xf32, #tpu.memory_space<vmem>>, vector<8x32xf32>,
    } else {
    }
    %c0 = arith.constant 0 : index
    %c0_1 = arith.constant 0 : index
    %3 = vector.load %arg2[%c0, %c0_1] : memref<8x1xi32, #tpu.memory_space<vmem>>, vector<8x1xi32>
    %c16_i32 = arith.constant 16 : i32
    %4 = arith.muli %arg1, %c16_i32 : i32
    %5 = tpu.iota {dimensions = array<i32: 1>} : vector<8x16xi32>
    %6 = vector.broadcast %4 : i32 to vector<8x16xi32>
    %7 = arith.addi %6, %5 : vector<8x16xi32>
    %8 = vector.broadcast %3 : vector<8x1xi32> to vector<8x16xi32>
    %9 = arith.cmpi eq, %8, %7 : vector<8x16xi32>
    %10 = arith.extui %9 : vector<8x16xi1> to vector<8x16xi32>
    %11 = arith.sitofp %10 : vector<8x16xi32> to vector<8x16xf32>
    %c0_2 = arith.constant 0 : index
    %c0_3 = arith.constant 0 : index
    %12 = vector.load %arg6[%c0_2, %c0_3] : memref<8x32xf32, #tpu.memory_space<vmem>>, vector<8x32xf32>
    %c0_4 = arith.constant 0 : index
    %c0_5 = arith.constant 0 : index
    %13 = vector.load %arg4[%c0_4, %c0_5] : memref<16x32xf32, #tpu.memory_space<vmem>>, vector<16x32xf32>
    %cst = arith.constant dense<0.000000e+00> : vector<8x32xf32>
    %14 = tpu.matmul %11, %13, %cst {dimension_numbers = #tpu.dot_dimension_numbers<[1], [0], [0], [1], [0, 0, 1, 1], [], []>, precision = #tpu.contract_precision<fp32>} : vector<8x16xf32>, vector<16x32xf32>, vector<8x32xf32> -> vector<8x32xf32>
    %15 = arith.addf %12, %14 : vector<8x32xf32>
    %c0_6 = arith.constant 0 : index
    %c0_7 = arith.constant 0 : index
    %16 = vector.load %arg6[%c0_6, %c0_7] : memref<8x32xf32, #tpu.memory_space<vmem>>, vector<8x32xf32>
    tpu.vector_store %arg6[%c0_6, %c0_7], %15 {strides = array<i32>} : memref<8x32xf32, #tpu.memory_space<vmem>>, vector<8x32xf32>,
    %c0_i32_8 = arith.constant 0 : i32
    %17 = arith.cmpi eq, %arg1, %c0_i32_8 : i32
    %18 = arith.extui %17 : i1 to i32
    %c0_i32_9 = arith.constant 0 : i32
    %19 = arith.cmpi ne, %18, %c0_i32_9 : i32
    scf.if %19 {
      %c0_10 = arith.constant 0 : index
      %c0_11 = arith.constant 0 : index
      %20 = vector.load %arg3[%c0_10, %c0_11] : memref<8x32xf32, #tpu.memory_space<vmem>>, vector<8x32xf32>
      %c0_12 = arith.constant 0 : index
      %c0_13 = arith.constant 0 : index
      %21 = vector.load %arg6[%c0_12, %c0_13] : memref<8x32xf32, #tpu.memory_space<vmem>>, vector<8x32xf32>
      %22 = arith.subf %20, %21 : vector<8x32xf32>
      %23 = arith.mulf %22, %22 : vector<8x32xf32>
      %cst_14 = arith.constant dense<0.000000e+00> : vector<8xf32>
      %24 = vector.multi_reduction <add>, %23, %cst_14 [1] : vector<8x32xf32> to vector<8xf32>
      %25 = vector.shape_cast %24 : vector<8xf32> to vector<8x1xf32>
      %cst_15 = arith.constant 9.99999996E-13 : f32
      %26 = vector.broadcast %cst_15 : f32 to vector<8x1xf32>
      %27 = arith.maximumf %25, %26 : vector<8x1xf32>
      %28 = math.sqrt %27 : vector<8x1xf32>
      %29 = vector.shape_cast %28 : vector<8x1xf32> to vector<1x8x1xf32>
      %cst_16 = arith.constant dense<0.000000e+00> : vector<1xf32>
      %30 = vector.multi_reduction <add>, %29, %cst_16 [1, 2] : vector<1x8x1xf32> to vector<1xf32>
      %31 = vector.shape_cast %30 : vector<1xf32> to vector<1x1x1xf32>
      %32 = vector.extract %31[0, 0, 0] : f32 from vector<1x1x1xf32>
      %33 = vector.broadcast %32 : f32 to vector<8x128xf32>
      %c0_17 = arith.constant 0 : index
      %c0_18 = arith.constant 0 : index
      %34 = vector.load %arg5[%c0_17, %c0_18] : memref<8x128xf32, #tpu.memory_space<vmem>>, vector<8x128xf32>
      tpu.vector_store %arg5[%c0_17, %c0_18], %33 {strides = array<i32>} : memref<8x128xf32, #tpu.memory_space<vmem>>, vector<8x128xf32>,
    } else {
    }
    return
  }
  func.func @transform_0(%arg0: i32, %arg1: i32) -> (i32, i32) {
    %c0_i32 = arith.constant 0 : i32
    %c0_i32_0 = arith.constant 0 : i32
    return %arg0, %c0_i32 : i32, i32
  }
  func.func @transform_1(%arg0: i32, %arg1: i32) -> (i32, i32) {
    %c0_i32 = arith.constant 0 : i32
    %c0_i32_0 = arith.constant 0 : i32
    return %arg0, %c0_i32 : i32, i32
  }
  func.func @transform_2(%arg0: i32, %arg1: i32) -> (i32, i32) {
    %c0_i32 = arith.constant 0 : i32
    %c0_i32_0 = arith.constant 0 : i32
    return %arg1, %c0_i32 : i32, i32
  }
  func.func @transform_3(%arg0: i32, %arg1: i32) -> (i32, i32) {
    %c0_i32 = arith.constant 0 : i32
    %c0_i32_0 = arith.constant 0 : i32
    return %arg0, %c0_i32 : i32, i32
  }
}

</mosaic_0001>

<llo_original>
// kernel: tpu_custom_call.1
$region0: #{tpu_custom_call.1}
  #allocation0 [shape = 'u32[]', space=smem, size = 0x4, offset = 0x4, fixed_abs, tag = 'smem constant byte address 0x4 - core index']
  #allocation1 [shape = 'u32[144,128]{1,0:T(1,128)}', space=vmem, size = 0x12000, scoped, tag = 'internal scratch']
  #allocation2 [shape = 'f32[8,32]{1,0:T(8,128)}', space=vmem, size = 0x1000, scoped, tag = 'scratch operand']
  %s0 = inlined_call_operand.vmem [shape: s32[8,1], index: 0, kind: input, shape index: {}]
  %s1 = inlined_call_operand.vmem [shape: f32[8,32], index: 1, kind: input, shape index: {}]
  %s2 = inlined_call_operand.hbm [shape: f32[16,32], index: 2, kind: input, shape index: {}]
  %s3 = inlined_call_operand.hbm [shape: f32[8,128], index: 3, kind: output, shape index: {}]
  %s4 = sld [smem:[#allocation0]]
  $region34: #{tpu_custom_call.1} parent=0
    _
  %s6 = ssub.s32 1, %s4
  %s7 = scalar_select 0, %s6, %s4
  $region1: #{tpu_custom_call.1} parent=0
    #allocation3 [shape = 'u8[8192]{0}', space=vmem, size = 0x2000, scoped, tag = 'input window, operand 2, single buffered']
    #allocation4 [shape = 's32[1]{0}', space=sflag, size = 0x4, scoped, tag = 'scoped memory for tpu_custom_call.1']
    #allocation5 [shape = 's32[1]{0}', space=sflag, size = 0x4, scoped, tag = 'scoped memory for tpu_custom_call.1']
    #allocation6 [shape = 'u8[4096]{0}', space=vmem, size = 0x1000, scoped, tag = 'output window, operand 0, single buffered']
    %8 = vsyncpa [#allocation4], 0
    %9 = vsyncpa [#allocation5], 0
    // Predicated region
    $region2: #{tpu_custom_call.1} parent=1 // pred_check
      _
    $region3: #{tpu_custom_call.1} parent=1 // pred_check_branch
      %11 = sbr.rel (0) target = $region5
    $region4: #{tpu_custom_call.1} parent=1 // pred_region
      _
    $region5: #{tpu_custom_call.1} parent=1 // pred_fallthru
      _
    // Predicated region
    $region6: #{tpu_custom_call.1} parent=1 // pred_check
      _
    $region7: #{tpu_custom_call.1} parent=1 // pred_check_branch
      %13 = sbr.rel (0) target = $region9
    $region8: #{tpu_custom_call.1} parent=1 // pred_region
      _
    $region9: #{tpu_custom_call.1} parent=1 // pred_fallthru
      _
    // Predicated region
    $region10: #{tpu_custom_call.1} parent=1 // pred_check
      _
    $region11: #{tpu_custom_call.1} parent=1 // pred_check_branch
      %15 = sbr.rel (0) target = $region13
    $region12: #{tpu_custom_call.1} parent=1 // pred_region
      %s17 = ssub.s32 256, 256
      %18 = vsyncadd [#allocation4], %s17
      %s19 = sshll.u32 [#allocation3], 4
      %s20 = int_to_ptr.vmem [resolvable:$true] %s19
      %25 = dma.hbm_to_vmem [thread:$0]  %s2, 256, %s20, [#allocation4], 128, 128, 8
    $region13: #{tpu_custom_call.1} parent=1 // pred_fallthru
      _
    // Predicated region
    $region14: #{tpu_custom_call.1} parent=1 // pred_check
      _
    $region15: #{tpu_custom_call.1} parent=1 // pred_check_branch
      %27 = sbr.rel (0) target = $region17
    $region16: #{tpu_custom_call.1} parent=1 // pred_region
      %28 = dma.done [#allocation4], 256
    $region17: #{tpu_custom_call.1} parent=1 // pred_fallthru
      _
    %p29 = scmp.eq.s32.totalorder 0, 0
    // Predicated region
    $region18: #{tpu_custom_call.1} parent=1 // pred_check
      %p30 = pneg %p29
    $region19: #{tpu_custom_call.1} parent=1 // pred_check_branch
      %32 = sbr.rel (%p30) target = $region21
    $region20: #{tpu_custom_call.1} parent=1 // pred_region
      %vm33 = vcmask 261120
      %34 = vst.msk [vmem:[#allocation2] sm:$0xff] %vm33, 0.0
    $region21: #{tpu_custom_call.1} parent=1 // pred_fallthru
      _
    %v35 = vld [vmem:[%s0] sm:$0xff]
    %s36 = smul.u32 0, 16
    %v37 = vlaneseq
    %v38 = vand.u32 %v37, 127
    %v39 = vstv %s36
    %v40 = vadd.s32 %v39, %v38
    %41 = vset.pattern.permute.xlu0 0
    %42 = vperm.xlu0 %41, %v35
    %v43 = vpop.permute.xlu0 %42
    %vm44 = vcmp.eq.s32.totalorder %v43, %v40
    %v45 = vsel %vm44, 1, 0
    %v46 = vcvt.s32.f32 %v45
    %v47 = vld [vmem:[#allocation2] sm:$0xff]
    %v48 = vld [vmem:[#allocation3] sm:$0xff]
    %v49 = vld [vmem:[#allocation3 + $0x8] sm:$0xff]
    %vm50 = vcmask 130048
    %v52 = vsel %vm50, %v46, 0
    %54 = vmatprep.subr.mxu0 0.0
    %55 = vmatpush1.msra.mxu0 0.0
    %56 = vmatprep.subr.mxu0 0.0
    %57 = vmatpush1.msra.mxu0 0.0
    %58 = vmatprep.subr.mxu0 0.0
    %59 = vmatpush1.msra.mxu0 0.0
    %60 = vmatprep.subr.mxu0 0.0
    %61 = vmatpush1.msra.mxu0 0.0
    %62 = vmatprep.subr.mxu0 0.0
    %63 = vmatpush1.msra.mxu0 0.0
    %64 = vmatprep.subr.mxu0 0.0
    %65 = vmatpush1.msra.mxu0 0.0
    %66 = vmatprep.subr.mxu0 0.0
    %67 = vmatpush1.msra.mxu0 0.0
    %68 = vmatprep.subr.mxu0 0.0
    %69 = vmatpush1.msra.mxu0 0.0
    %70 = vmatprep.subr.mxu0 0.0
    %71 = vmatpush1.msra.mxu0 0.0
    %72 = vmatprep.subr.mxu0 0.0
    %73 = vmatpush1.msra.mxu0 0.0
    %74 = vmatprep.subr.mxu0 0.0
    %75 = vmatpush1.msra.mxu0 0.0
    %76 = vmatprep.subr.mxu0 0.0
    %77 = vmatpush1.msra.mxu0 0.0
    %78 = vmatprep.subr.mxu0 0.0
    %79 = vmatpush1.msra.mxu0 0.0
    %80 = vmatprep.subr.mxu0 0.0
    %81 = vmatpush1.msra.mxu0 0.0
    %82 = vmatprep.subr.mxu0 0.0
    %v83 = vand.u32 %v49, 4294901760
    %84 = vmatpush1.msra.mxu0 %v83
    %85 = vmatprep.subr.mxu0 0.0
    %v86 = vand.u32 %v48, 4294901760
    %87 = vmatpush1.msra.mxu0 %v86
    %88 = vmatprep.subr.mxu0 0.0
    %89 = vmatpush2.msra.mxu0 0.0
    %90 = vmatprep.subr.mxu0 0.0
    %91 = vmatpush2.msra.mxu0 0.0
    %92 = vmatprep.subr.mxu0 0.0
    %93 = vmatpush2.msra.mxu0 0.0
    %94 = vmatprep.subr.mxu0 0.0
    %95 = vmatpush2.msra.mxu0 0.0
    %96 = vmatprep.subr.mxu0 0.0
    %97 = vmatpush2.msra.mxu0 0.0
    %98 = vmatprep.subr.mxu0 0.0
    %99 = vmatpush2.msra.mxu0 0.0
    %100 = vmatprep.subr.mxu0 0.0
    %101 = vmatpush2.msra.mxu0 0.0
    %102 = vmatprep.subr.mxu0 0.0
    %103 = vmatpush2.msra.mxu0 0.0
    %104 = vmatprep.subr.mxu0 0.0
    %105 = vmatpush2.msra.mxu0 0.0
    %106 = vmatprep.subr.mxu0 0.0
    %107 = vmatpush2.msra.mxu0 0.0
    %108 = vmatprep.subr.mxu0 0.0
    %109 = vmatpush2.msra.mxu0 0.0
    %110 = vmatprep.subr.mxu0 0.0
    %111 = vmatpush2.msra.mxu0 0.0
    %112 = vmatprep.subr.mxu0 0.0
    %113 = vmatpush2.msra.mxu0 0.0
    %114 = vmatprep.subr.mxu0 0.0
    %115 = vmatpush2.msra.mxu0 0.0
    %116 = vmatprep.subr.mxu0 0.0
    %117 = vmatpush2.msra.mxu0 0.0
    %118 = vmatprep.subr.mxu0 0.0
    %119 = vmatpush2.msra.mxu0 0.0
    %120 = vmatprep.mubr.f32.mxu0 0.0
    %v121 = vand.u32 %v52, 4294901760
    %v122 = vsub.f32 %v52, %v121
    %v123 = vand.u32 %v122, 4294901760
    %v124 = vsub.f32 %v122, %v123
    %v125 = vand.u32 %v124, 4294901760
    %126 = vmatmul.mubr.f32.gmra.mxu0 %v125
    %v127 = vpop.f32.mrf.mxu0
    %v128 = vadd.f32 0.0, %v127
    %v129 = vpop.f32.mrf.mxu0
    %130 = vdwg.mxu0
    %131 = vmatprep.subr.mxu0 0.0
    %132 = vmatpush1.msra.mxu0 0.0
    %133 = vmatprep.subr.mxu0 0.0
    %134 = vmatpush1.msra.mxu0 0.0
    %135 = vmatprep.subr.mxu0 0.0
    %136 = vmatpush1.msra.mxu0 0.0
    %137 = vmatprep.subr.mxu0 0.0
    %138 = vmatpush1.msra.mxu0 0.0
    %139 = vmatprep.subr.mxu0 0.0
    %140 = vmatpush1.msra.mxu0 0.0
    %141 = vmatprep.subr.mxu0 0.0
    %142 = vmatpush1.msra.mxu0 0.0
    %143 = vmatprep.subr.mxu0 0.0
    %144 = vmatpush1.msra.mxu0 0.0
    %145 = vmatprep.subr.mxu0 0.0
    %146 = vmatpush1.msra.mxu0 0.0
    %147 = vmatprep.subr.mxu0 0.0
    %148 = vmatpush1.msra.mxu0 0.0
    %149 = vmatprep.subr.mxu0 0.0
    %150 = vmatpush1.msra.mxu0 0.0
    %151 = vmatprep.subr.mxu0 0.0
    %152 = vmatpush1.msra.mxu0 0.0
    %153 = vmatprep.subr.mxu0 0.0
    %154 = vmatpush1.msra.mxu0 0.0
    %155 = vmatprep.subr.mxu0 0.0
    %156 = vmatpush1.msra.mxu0 0.0
    %157 = vmatprep.subr.mxu0 0.0
    %158 = vmatpush1.msra.mxu0 0.0
    %159 = vmatprep.subr.mxu0 0.0
    %v160 = vand.u32 %v49, 4294901760
    %v161 = vsub.f32 %v49, %v160
    %v162 = vand.u32 %v161, 4294901760
    %v163 = vsub.f32 %v161, %v162
    %v164 = vand.u32 %v163, 4294901760
    %165 = vmatpush1.msra.mxu0 %v164
    %166 = vmatprep.subr.mxu0 0.0
    %v167 = vand.u32 %v48, 4294901760
    %v168 = vsub.f32 %v48, %v167
    %v169 = vand.u32 %v168, 4294901760
    %v170 = vsub.f32 %v168, %v169
    %v171 = vand.u32 %v170, 4294901760
    %172 = vmatpush1.msra.mxu0 %v171
    %173 = vmatprep.subr.mxu0 0.0
    %174 = vmatpush2.msra.mxu0 0.0
    %175 = vmatprep.subr.mxu0 0.0
    %176 = vmatpush2.msra.mxu0 0.0
    %177 = vmatprep.subr.mxu0 0.0
    %178 = vmatpush2.msra.mxu0 0.0
    %179 = vmatprep.subr.mxu0 0.0
    %180 = vmatpush2.msra.mxu0 0.0
    %181 = vmatprep.subr.mxu0 0.0
    %182 = vmatpush2.msra.mxu0 0.0
    %183 = vmatprep.subr.mxu0 0.0
    %184 = vmatpush2.msra.mxu0 0.0
    %185 = vmatprep.subr.mxu0 0.0
    %186 = vmatpush2.msra.mxu0 0.0
    %187 = vmatprep.subr.mxu0 0.0
    %188 = vmatpush2.msra.mxu0 0.0
    %189 = vmatprep.subr.mxu0 0.0
    %190 = vmatpush2.msra.mxu0 0.0
    %191 = vmatprep.subr.mxu0 0.0
    %192 = vmatpush2.msra.mxu0 0.0
    %193 = vmatprep.subr.mxu0 0.0
    %194 = vmatpush2.msra.mxu0 0.0
    %195 = vmatprep.subr.mxu0 0.0
    %196 = vmatpush2.msra.mxu0 0.0
    %197 = vmatprep.subr.mxu0 0.0
    %198 = vmatpush2.msra.mxu0 0.0
    %199 = vmatprep.subr.mxu0 0.0
    %200 = vmatpush2.msra.mxu0 0.0
    %201 = vmatprep.subr.mxu0 0.0
    %202 = vmatpush2.msra.mxu0 0.0
    %203 = vmatprep.subr.mxu0 0.0
    %204 = vmatpush2.msra.mxu0 0.0
    %205 = vmatprep.mubr.f32.mxu0 0.0
    %v206 = vand.u32 %v52, 4294901760
    %207 = vmatmul.mubr.f32.gmra.mxu0 %v206
    %v208 = vpop.f32.mrf.mxu0
    %v209 = vadd.f32 %v128, %v208
    %v210 = vpop.f32.mrf.mxu0
    %211 = vdwg.mxu0
    %212 = vmatprep.subr.mxu0 0.0
    %213 = vmatpush1.msra.mxu0 0.0
    %214 = vmatprep.subr.mxu0 0.0
    %215 = vmatpush1.msra.mxu0 0.0
    %216 = vmatprep.subr.mxu0 0.0
    %217 = vmatpush1.msra.mxu0 0.0
    %218 = vmatprep.subr.mxu0 0.0
    %219 = vmatpush1.msra.mxu0 0.0
    %220 = vmatprep.subr.mxu0 0.0
    %221 = vmatpush1.msra.mxu0 0.0
    %222 = vmatprep.subr.mxu0 0.0
    %223 = vmatpush1.msra.mxu0 0.0
    %224 = vmatprep.subr.mxu0 0.0
    %225 = vmatpush1.msra.mxu0 0.0
    %226 = vmatprep.subr.mxu0 0.0
    %227 = vmatpush1.msra.mxu0 0.0
    %228 = vmatprep.subr.mxu0 0.0
    %229 = vmatpush1.msra.mxu0 0.0
    %230 = vmatprep.subr.mxu0 0.0
    %231 = vmatpush1.msra.mxu0 0.0
    %232 = vmatprep.subr.mxu0 0.0
    %233 = vmatpush1.msra.mxu0 0.0
    %234 = vmatprep.subr.mxu0 0.0
    %235 = vmatpush1.msra.mxu0 0.0
    %236 = vmatprep.subr.mxu0 0.0
    %237 = vmatpush1.msra.mxu0 0.0
    %238 = vmatprep.subr.mxu0 0.0
    %239 = vmatpush1.msra.mxu0 0.0
    %240 = vmatprep.subr.mxu0 0.0
    %v241 = vand.u32 %v49, 4294901760
    %v242 = vsub.f32 %v49, %v241
    %243 = vmatpush1.msra.mxu0 %v242
    %244 = vmatprep.subr.mxu0 0.0
    %v245 = vand.u32 %v48, 4294901760
    %v246 = vsub.f32 %v48, %v245
    %247 = vmatpush1.msra.mxu0 %v246
    %248 = vmatprep.subr.mxu0 0.0
    %249 = vmatpush2.msra.mxu0 0.0
    %250 = vmatprep.subr.mxu0 0.0
    %251 = vmatpush2.msra.mxu0 0.0
    %252 = vmatprep.subr.mxu0 0.0
    %253 = vmatpush2.msra.mxu0 0.0
    %254 = vmatprep.subr.mxu0 0.0
    %255 = vmatpush2.msra.mxu0 0.0
    %256 = vmatprep.subr.mxu0 0.0
    %257 = vmatpush2.msra.mxu0 0.0
    %258 = vmatprep.subr.mxu0 0.0
    %259 = vmatpush2.msra.mxu0 0.0
    %260 = vmatprep.subr.mxu0 0.0
    %261 = vmatpush2.msra.mxu0 0.0
    %262 = vmatprep.subr.mxu0 0.0
    %263 = vmatpush2.msra.mxu0 0.0
    %264 = vmatprep.subr.mxu0 0.0
    %265 = vmatpush2.msra.mxu0 0.0
    %266 = vmatprep.subr.mxu0 0.0
    %267 = vmatpush2.msra.mxu0 0.0
    %268 = vmatprep.subr.mxu0 0.0
    %269 = vmatpush2.msra.mxu0 0.0
    %270 = vmatprep.subr.mxu0 0.0
    %271 = vmatpush2.msra.mxu0 0.0
    %272 = vmatprep.subr.mxu0 0.0
    %273 = vmatpush2.msra.mxu0 0.0
    %274 = vmatprep.subr.mxu0 0.0
    %275 = vmatpush2.msra.mxu0 0.0
    %276 = vmatprep.subr.mxu0 0.0
    %277 = vmatpush2.msra.mxu0 0.0
    %278 = vmatprep.subr.mxu0 0.0
    %279 = vmatpush2.msra.mxu0 0.0
    %280 = vmatprep.mubr.f32.mxu0 0.0
    %v281 = vand.u32 %v52, 4294901760
    %v282 = vsub.f32 %v52, %v281
    %283 = vmatmul.mubr.f32.gmra.mxu0 %v282
    %v284 = vpop.f32.mrf.mxu0
    %v285 = vadd.f32 %v209, %v284
    %v286 = vpop.f32.mrf.mxu0
    %287 = vdwg.mxu0
    %288 = vmatprep.subr.mxu0 0.0
    %289 = vmatpush1.msra.mxu0 0.0
    %290 = vmatprep.subr.mxu0 0.0
    %291 = vmatpush1.msra.mxu0 0.0
    %292 = vmatprep.subr.mxu0 0.0
    %293 = vmatpush1.msra.mxu0 0.0
    %294 = vmatprep.subr.mxu0 0.0
    %295 = vmatpush1.msra.mxu0 0.0
    %296 = vmatprep.subr.mxu0 0.0
    %297 = vmatpush1.msra.mxu0 0.0
    %298 = vmatprep.subr.mxu0 0.0
    %299 = vmatpush1.msra.mxu0 0.0
    %300 = vmatprep.subr.mxu0 0.0
    %301 = vmatpush1.msra.mxu0 0.0
    %302 = vmatprep.subr.mxu0 0.0
    %303 = vmatpush1.msra.mxu0 0.0
    %304 = vmatprep.subr.mxu0 0.0
    %305 = vmatpush1.msra.mxu0 0.0
    %306 = vmatprep.subr.mxu0 0.0
    %307 = vmatpush1.msra.mxu0 0.0
    %308 = vmatprep.subr.mxu0 0.0
    %309 = vmatpush1.msra.mxu0 0.0
    %310 = vmatprep.subr.mxu0 0.0
    %311 = vmatpush1.msra.mxu0 0.0
    %312 = vmatprep.subr.mxu0 0.0
    %313 = vmatpush1.msra.mxu0 0.0
    %314 = vmatprep.subr.mxu0 0.0
    %315 = vmatpush1.msra.mxu0 0.0
    %316 = vmatprep.subr.mxu0 0.0
    %v317 = vand.u32 %v49, 4294901760
    %318 = vmatpush1.msra.mxu0 %v317
    %319 = vmatprep.subr.mxu0 0.0
    %v320 = vand.u32 %v48, 4294901760
    %321 = vmatpush1.msra.mxu0 %v320
    %322 = vmatprep.subr.mxu0 0.0
    %323 = vmatpush2.msra.mxu0 0.0
    %324 = vmatprep.subr.mxu0 0.0
    %325 = vmatpush2.msra.mxu0 0.0
    %326 = vmatprep.subr.mxu0 0.0
    %327 = vmatpush2.msra.mxu0 0.0
    %328 = vmatprep.subr.mxu0 0.0
    %329 = vmatpush2.msra.mxu0 0.0
    %330 = vmatprep.subr.mxu0 0.0
    %331 = vmatpush2.msra.mxu0 0.0
    %332 = vmatprep.subr.mxu0 0.0
    %333 = vmatpush2.msra.mxu0 0.0
    %334 = vmatprep.subr.mxu0 0.0
    %335 = vmatpush2.msra.mxu0 0.0
    %336 = vmatprep.subr.mxu0 0.0
    %337 = vmatpush2.msra.mxu0 0.0
    %338 = vmatprep.subr.mxu0 0.0
    %339 = vmatpush2.msra.mxu0 0.0
    %340 = vmatprep.subr.mxu0 0.0
    %341 = vmatpush2.msra.mxu0 0.0
    %342 = vmatprep.subr.mxu0 0.0
    %343 = vmatpush2.msra.mxu0 0.0
    %344 = vmatprep.subr.mxu0 0.0
    %345 = vmatpush2.msra.mxu0 0.0
    %346 = vmatprep.subr.mxu0 0.0
    %347 = vmatpush2.msra.mxu0 0.0
    %348 = vmatprep.subr.mxu0 0.0
    %349 = vmatpush2.msra.mxu0 0.0
    %350 = vmatprep.subr.mxu0 0.0
    %351 = vmatpush2.msra.mxu0 0.0
    %352 = vmatprep.subr.mxu0 0.0
    %353 = vmatpush2.msra.mxu0 0.0
    %354 = vmatprep.mubr.f32.mxu0 0.0
    %v355 = vand.u32 %v52, 4294901760
    %v356 = vsub.f32 %v52, %v355
    %v357 = vand.u32 %v356, 4294901760
    %358 = vmatmul.mubr.f32.gmra.mxu0 %v357
    %v359 = vpop.f32.mrf.mxu0
    %v360 = vadd.f32 %v285, %v359
    %v361 = vpop.f32.mrf.mxu0
    %362 = vdwg.mxu0
    %363 = vmatprep.subr.mxu0 0.0
    %364 = vmatpush1.msra.mxu0 0.0
    %365 = vmatprep.subr.mxu0 0.0
    %366 = vmatpush1.msra.mxu0 0.0
    %367 = vmatprep.subr.mxu0 0.0
    %368 = vmatpush1.msra.mxu0 0.0
    %369 = vmatprep.subr.mxu0 0.0
    %370 = vmatpush1.msra.mxu0 0.0
    %371 = vmatprep.subr.mxu0 0.0
    %372 = vmatpush1.msra.mxu0 0.0
    %373 = vmatprep.subr.mxu0 0.0
    %374 = vmatpush1.msra.mxu0 0.0
    %375 = vmatprep.subr.mxu0 0.0
    %376 = vmatpush1.msra.mxu0 0.0
    %377 = vmatprep.subr.mxu0 0.0
    %378 = vmatpush1.msra.mxu0 0.0
    %379 = vmatprep.subr.mxu0 0.0
    %380 = vmatpush1.msra.mxu0 0.0
    %381 = vmatprep.subr.mxu0 0.0
    %382 = vmatpush1.msra.mxu0 0.0
    %383 = vmatprep.subr.mxu0 0.0
    %384 = vmatpush1.msra.mxu0 0.0
    %385 = vmatprep.subr.mxu0 0.0
    %386 = vmatpush1.msra.mxu0 0.0
    %387 = vmatprep.subr.mxu0 0.0
    %388 = vmatpush1.msra.mxu0 0.0
    %389 = vmatprep.subr.mxu0 0.0
    %390 = vmatpush1.msra.mxu0 0.0
    %391 = vmatprep.subr.mxu0 0.0
    %v392 = vand.u32 %v49, 4294901760
    %v393 = vsub.f32 %v49, %v392
    %v394 = vand.u32 %v393, 4294901760
    %395 = vmatpush1.msra.mxu0 %v394
    %396 = vmatprep.subr.mxu0 0.0
    %v397 = vand.u32 %v48, 4294901760
    %v398 = vsub.f32 %v48, %v397
    %v399 = vand.u32 %v398, 4294901760
    %400 = vmatpush1.msra.mxu0 %v399
    %401 = vmatprep.subr.mxu0 0.0
    %402 = vmatpush2.msra.mxu0 0.0
    %403 = vmatprep.subr.mxu0 0.0
    %404 = vmatpush2.msra.mxu0 0.0
    %405 = vmatprep.subr.mxu0 0.0
    %406 = vmatpush2.msra.mxu0 0.0
    %407 = vmatprep.subr.mxu0 0.0
    %408 = vmatpush2.msra.mxu0 0.0
    %409 = vmatprep.subr.mxu0 0.0
    %410 = vmatpush2.msra.mxu0 0.0
    %411 = vmatprep.subr.mxu0 0.0
    %412 = vmatpush2.msra.mxu0 0.0
    %413 = vmatprep.subr.mxu0 0.0
    %414 = vmatpush2.msra.mxu0 0.0
    %415 = vmatprep.subr.mxu0 0.0
    %416 = vmatpush2.msra.mxu0 0.0
    %417 = vmatprep.subr.mxu0 0.0
    %418 = vmatpush2.msra.mxu0 0.0
    %419 = vmatprep.subr.mxu0 0.0
    %420 = vmatpush2.msra.mxu0 0.0
    %421 = vmatprep.subr.mxu0 0.0
    %422 = vmatpush2.msra.mxu0 0.0
    %423 = vmatprep.subr.mxu0 0.0
    %424 = vmatpush2.msra.mxu0 0.0
    %425 = vmatprep.subr.mxu0 0.0
    %426 = vmatpush2.msra.mxu0 0.0
    %427 = vmatprep.subr.mxu0 0.0
    %428 = vmatpush2.msra.mxu0 0.0
    %429 = vmatprep.subr.mxu0 0.0
    %430 = vmatpush2.msra.mxu0 0.0
    %431 = vmatprep.subr.mxu0 0.0
    %432 = vmatpush2.msra.mxu0 0.0
    %433 = vmatprep.mubr.f32.mxu0 0.0
    %v434 = vand.u32 %v52, 4294901760
    %435 = vmatmul.mubr.f32.gmra.mxu0 %v434
    %v436 = vpop.f32.mrf.mxu0
    %v437 = vadd.f32 %v360, %v436
    %v438 = vpop.f32.mrf.mxu0
    %439 = vdwg.mxu0
    %440 = vmatprep.subr.mxu0 0.0
    %441 = vmatpush1.msra.mxu0 0.0
    %442 = vmatprep.subr.mxu0 0.0
    %443 = vmatpush1.msra.mxu0 0.0
    %444 = vmatprep.subr.mxu0 0.0
    %445 = vmatpush1.msra.mxu0 0.0
    %446 = vmatprep.subr.mxu0 0.0
    %447 = vmatpush1.msra.mxu0 0.0
    %448 = vmatprep.subr.mxu0 0.0
    %449 = vmatpush1.msra.mxu0 0.0
    %450 = vmatprep.subr.mxu0 0.0
    %451 = vmatpush1.msra.mxu0 0.0
    %452 = vmatprep.subr.mxu0 0.0
    %453 = vmatpush1.msra.mxu0 0.0
    %454 = vmatprep.subr.mxu0 0.0
    %455 = vmatpush1.msra.mxu0 0.0
    %456 = vmatprep.subr.mxu0 0.0
    %457 = vmatpush1.msra.mxu0 0.0
    %458 = vmatprep.subr.mxu0 0.0
    %459 = vmatpush1.msra.mxu0 0.0
    %460 = vmatprep.subr.mxu0 0.0
    %461 = vmatpush1.msra.mxu0 0.0
    %462 = vmatprep.subr.mxu0 0.0
    %463 = vmatpush1.msra.mxu0 0.0
    %464 = vmatprep.subr.mxu0 0.0
    %465 = vmatpush1.msra.mxu0 0.0
    %466 = vmatprep.subr.mxu0 0.0
    %467 = vmatpush1.msra.mxu0 0.0
    %468 = vmatprep.subr.mxu0 0.0
    %v469 = vand.u32 %v49, 4294901760
    %470 = vmatpush1.msra.mxu0 %v469
    %471 = vmatprep.subr.mxu0 0.0
    %v472 = vand.u32 %v48, 4294901760
    %473 = vmatpush1.msra.mxu0 %v472
    %474 = vmatprep.subr.mxu0 0.0
    %475 = vmatpush2.msra.mxu0 0.0
    %476 = vmatprep.subr.mxu0 0.0
    %477 = vmatpush2.msra.mxu0 0.0
    %478 = vmatprep.subr.mxu0 0.0
    %479 = vmatpush2.msra.mxu0 0.0
    %480 = vmatprep.subr.mxu0 0.0
    %481 = vmatpush2.msra.mxu0 0.0
    %482 = vmatprep.subr.mxu0 0.0
    %483 = vmatpush2.msra.mxu0 0.0
    %484 = vmatprep.subr.mxu0 0.0
    %485 = vmatpush2.msra.mxu0 0.0
    %486 = vmatprep.subr.mxu0 0.0
    %487 = vmatpush2.msra.mxu0 0.0
    %488 = vmatprep.subr.mxu0 0.0
    %489 = vmatpush2.msra.mxu0 0.0
    %490 = vmatprep.subr.mxu0 0.0
    %491 = vmatpush2.msra.mxu0 0.0
    %492 = vmatprep.subr.mxu0 0.0
    %493 = vmatpush2.msra.mxu0 0.0
    %494 = vmatprep.subr.mxu0 0.0
    %495 = vmatpush2.msra.mxu0 0.0
    %496 = vmatprep.subr.mxu0 0.0
    %497 = vmatpush2.msra.mxu0 0.0
    %498 = vmatprep.subr.mxu0 0.0
    %499 = vmatpush2.msra.mxu0 0.0
    %500 = vmatprep.subr.mxu0 0.0
    %501 = vmatpush2.msra.mxu0 0.0
    %502 = vmatprep.subr.mxu0 0.0
    %503 = vmatpush2.msra.mxu0 0.0
    %504 = vmatprep.subr.mxu0 0.0
    %505 = vmatpush2.msra.mxu0 0.0
    %506 = vmatprep.mubr.f32.mxu0 0.0
    %v507 = vand.u32 %v52, 4294901760
    %508 = vmatmul.mubr.f32.gmra.mxu0 %v507
    %v509 = vpop.f32.mrf.mxu0
    %v510 = vadd.f32 %v437, %v509
    %v511 = vpop.f32.mrf.mxu0
    %512 = vdwg.mxu0
    %v513 = vadd.f32 %v47, %v510
    %vm514 = vcmask 261120
    %515 = vst.msk [vmem:[#allocation2] sm:$0xff] %vm514, %v513
    // Predicated region
    $region22: #{tpu_custom_call.1} parent=1 // pred_check
      %p516 = pneg %p29
    $region23: #{tpu_custom_call.1} parent=1 // pred_check_branch
      %518 = sbr.rel (%p516) target = $region25
    $region24: #{tpu_custom_call.1} parent=1 // pred_region
      %v519 = vld [vmem:[%s1] sm:$0xff]
      %v520 = vld [vmem:[#allocation2] sm:$0xff]
      %v521 = vsub.f32 %v519, %v520
      %v522 = vmul.f32 %v521, %v521
      %v523 = vsel %vm514, %v522, 0.0
      %524 = vadd.xlane.f32.xlu0 %v523
      %v525 = vpop.xlane.xlu0 %524
      %v526 = vmax.f32 %v525, 1e-12
      %v527 = vrsqrt.pop %v526
      %v528 = vmul.f32 %v526, %v527
      %vm529 = vcmp.eq.f32.partialorder %v526, inf
      %v530 = vsel %vm529, %v526, %v528
      %vm531 = vcmp.eq.f32.partialorder %v526, 0.0
      %v532 = vand.u32 %v526, 2147483648
      %v533 = vsel %vm531, %v532, %v530
      %vm534 = vcmask 7168
      %v535 = vsel %vm534, %v533, 0.0
      %536 = vadd.xlane.f32.xlu0 %v535
      %v537 = vpop.xlane.xlu0 %536
      %v538 = vrot.slane %v537, 4
      %v539 = vadd.f32 %v537, %v538
      %v540 = vrot.slane %v539, 2
      %v541 = vadd.f32 %v539, %v540
      %v542 = vrot.slane %v541, 1
      %v543 = vadd.f32 %v541, %v542
      %s544 = vtos %v543
      %v545 = vstv %s544
      %546 = vst [vmem:[#allocation6] sm:$0xff] %v545
    $region25: #{tpu_custom_call.1} parent=1 // pred_fallthru
      _
    // Predicated region
    $region26: #{tpu_custom_call.1} parent=1 // pred_check
      _
    $region27: #{tpu_custom_call.1} parent=1 // pred_check_branch
      %548 = sbr.rel (0) target = $region29
    $region28: #{tpu_custom_call.1} parent=1 // pred_region
      %s550 = ssub.s32 128, 128
      %551 = vsyncadd [#allocation5], %s550
      %s553 = sshll.u32 [#allocation6], 4
      %s554 = int_to_ptr.vmem [resolvable:$true] %s553
      %556 = dma.vmem_to_hbm [thread:$0]  %s554, 128, %s3, [#allocation5]
    $region29: #{tpu_custom_call.1} parent=1 // pred_fallthru
      _
    // Predicated region
    $region30: #{tpu_custom_call.1} parent=1 // pred_check
      _
    $region31: #{tpu_custom_call.1} parent=1 // pred_check_branch
      %558 = sbr.rel (0) target = $region33
    $region32: #{tpu_custom_call.1} parent=1 // pred_region
      %559 = dma.done [#allocation5], 128
    $region33: #{tpu_custom_call.1} parent=1 // pred_fallthru
      _
    %560 = vsyncpa [#allocation4], 1
    %561 = vsyncpa [#allocation5], 1

</llo_original>
